<compile_context>
chip_gen: v7x
topology: tpu7x:2x2x1
jax: 0.10.0
libtpu: 0.0.40
codegen_flags: <defaults>
</compile_context>

<pallas_src>
import functools

import jax
import jax.numpy as jnp
from jax.experimental import pallas as pl
from jax.experimental.pallas import tpu as pltpu


# ----------------------------- helpers ------------------------------------


def _round_up(n, m):
    return ((n + m - 1) // m) * m


def _pad_dim(d, lane_align=128):
    """Interior (in-kernel-only) feature dims: small dims only need sublane (8) alignment
    (avoids 8x DMA inflation); large dims keep MXU/lane alignment (128, or 256 on v6e/v7x)."""
    if d >= lane_align:
        return _round_up(d, lane_align)
    return _round_up(d, 8)


# ----------------------------- kernel ------------------------------------


def _fused_mlp_kernel(*refs, num_relu_layers):
    """refs = (x, w0, b0, ..., w_last, b_last, out).

    First `num_relu_layers` (w, b) pairs are ReLU layers; the final pair is the fused
    [mu | logvar] head (no activation). Matmuls accumulate in f32 on the MXU; bias-add
    and ReLU stay f32 (v5e VPU has no bf16)."""
    x_ref = refs[0]
    o_ref = refs[-1]
    layer_refs = refs[1:-1]

    h = x_ref[...].astype(jnp.float32)
    for i in range(num_relu_layers):  # Python-unrolled at trace time
        w = layer_refs[2 * i][...]
        b = layer_refs[2 * i + 1][...]
        h = jnp.dot(h.astype(w.dtype), w, preferred_element_type=jnp.float32) + b
        h = jnp.maximum(h, 0.0)

    w = layer_refs[-2][...]
    b = layer_refs[-1][...]
    o_ref[...] = (
        jnp.dot(h.astype(w.dtype), w, preferred_element_type=jnp.float32) + b
    ).astype(o_ref.dtype)


# ----------------------------- params ------------------------------------


def init_encoder_params(key, in_dim, mu_out_dim, logvar_out_dim, hidden_layers):
    """Deterministic parameter init (same shapes as the nn.Linear layers, stored (in, out))."""
    params = {}

    def make_linear(k, fan_in, fan_out):
        kw, kb = jax.random.split(k)
        bound = 1.0 / jnp.sqrt(jnp.float32(fan_in))
        w = jax.random.uniform(kw, (fan_in, fan_out), jnp.float32, -bound, bound)
        b = jax.random.uniform(kb, (fan_out,), jnp.float32, -bound, bound)
        return w, b

    keys = jax.random.split(key, len(hidden_layers) + 2)

    params["in_fc"] = make_linear(keys[0], in_dim, hidden_layers[0])
    params["hidden"] = []
    for i in range(len(hidden_layers) - 1):
        params["hidden"].append(
            make_linear(keys[1 + i], hidden_layers[i], hidden_layers[i + 1]))
    params["mu"] = make_linear(keys[-2], hidden_layers[-1], mu_out_dim)
    params["logvar"] = make_linear(keys[-1], hidden_layers[-1], logvar_out_dim)
    return params


def pack_encoder_params(params, *, weight_dtype=jnp.float32, lane_align=128):
    """Fuse mu/logvar heads into one matmul and pad dims for the TPU kernel.

    Padding policy:
      * K / hidden widths: multiple of 8 when small, multiple of `lane_align` when >=128.
      * fused head output: multiple of 128 -> unmasked lane-dense output stores.
    Zero padding is exact: padded K rows see zero inputs, padded N cols have zero
    weight + zero bias; ReLU(0) == 0 propagates cleanly.
    """
    w_mu, b_mu = params["mu"]
    w_lv, b_lv = params["logvar"]
    w_heads = jnp.concatenate([w_mu, w_lv], axis=1)
    b_heads = jnp.concatenate([b_mu, b_lv], axis=0)

    layers = [params["in_fc"]] + list(params["hidden"]) + [(w_heads, b_heads)]
    last = len(layers) - 1

    ws, bs = [], []
    for li, (w, b) in enumerate(layers):
        k_in, k_out = w.shape
        k_in_p = _pad_dim(k_in, lane_align)
        k_out_p = _round_up(k_out, 128) if li == last else _pad_dim(k_out, lane_align)
        w_p = jnp.zeros((k_in_p, k_out_p), weight_dtype)
        w_p = w_p.at[:k_in, :k_out].set(w.astype(weight_dtype))
        b_p = jnp.zeros((1, k_out_p), jnp.float32).at[0, :k_out].set(b.astype(jnp.float32))
        ws.append(w_p)
        bs.append(b_p)

    meta = {
        "in_dim": int(params["in_fc"][0].shape[0]),
        "mu_out_dim": int(w_mu.shape[1]),
        "logvar_out_dim": int(w_lv.shape[1]),
        "num_relu_layers": len(layers) - 1,
    }
    return {"ws": ws, "bs": bs, "meta": meta}


# ----------------------------- forward ------------------------------------


def _pick_batch_tile(M):
    """Big batch tiles amortize the ~0.35us/step pipeline overhead, while guaranteeing
    >=2 grid steps for large batches so both v7x TensorCores get work."""
    m8 = _round_up(max(M, 8), 8)
    if m8 > 1024:
        tile_m = 512                                  # sweep 512-1024 at scale
    elif m8 > 512:
        tile_m = _round_up((m8 + 1) // 2, 8)          # exactly 2 parallel steps, minimal pad
    else:
        tile_m = m8                                   # single step: tiny batches are overhead bound
    return tile_m, _round_up(m8, tile_m)


def encoder_forward(packed, x):
    ws, bs, meta = packed["ws"], packed["bs"], packed["meta"]
    M, in_dim = x.shape
    assert in_dim == meta["in_dim"]
    in_pad = ws[0].shape[0]
    out_pad = ws[-1].shape[1]

    tile_m, m_pad = _pick_batch_tile(M)

    # Pad only what is actually needed (usually just a few ragged batch rows); the old
    # full zeros().at[].set() slab was an extra HBM round trip of the whole input.
    pad_m, pad_k = m_pad - M, in_pad - in_dim
    x_p = x if (pad_m == 0 and pad_k == 0) else jnp.pad(x, ((0, pad_m), (0, pad_k)))

    kernel = functools.partial(
        _fused_mlp_kernel, num_relu_layers=meta["num_relu_layers"])

    operands = [x_p]
    for w, b in zip(ws, bs):
        operands.append(w)
        operands.append(b)

    # Scoped-VMEM budget: double-buffered x/out tiles + (possibly double-buffered) weights
    # + headroom, clamped under v7x's 64 MiB physical VMEM.
    weight_bytes = sum(int(w.size) * w.dtype.itemsize + int(b.size) * 4
                       for w, b in zip(ws, bs))
    io_bytes = 2 * tile_m * (in_pad * x_p.dtype.itemsize + out_pad * 4)
    vmem_limit = int(min(max(2 * weight_bytes + io_bytes + (4 << 20), 32 << 20), 56 << 20))

    def build(weight_pipeline_mode):
        spec_kwargs = ({} if weight_pipeline_mode is None
                       else {"pipeline_mode": weight_pipeline_mode})
        in_specs = [pl.BlockSpec((tile_m, in_pad), lambda i: (i, 0))]
        for w, b in zip(ws, bs):
            in_specs.append(pl.BlockSpec(w.shape, lambda i: (0, 0), **spec_kwargs))
            in_specs.append(pl.BlockSpec(b.shape, lambda i: (0, 0), **spec_kwargs))
        return pl.pallas_call(
            kernel,
            out_shape=jax.ShapeDtypeStruct((m_pad, out_pad), jnp.float32),
            grid=(m_pad // tile_m,),
            in_specs=in_specs,
            out_specs=pl.BlockSpec((tile_m, out_pad), lambda i: (i, 0)),
            compiler_params=pltpu.CompilerParams(
                dimension_semantics=("parallel",),
                vmem_limit_bytes=vmem_limit),
        )

    try:
        # Grid-invariant weights only need a single VMEM buffer; halves resident weight
        # VMEM (matters most on v7x's 64 MiB when hidden dims scale up).
        out = build(pl.Buffered(1))(*operands)
    except Exception:
        # Fallback for jax versions that reject single-buffered pallas_call inputs.
        out = build(None)(*operands)

    n_mu = meta["mu_out_dim"]
    n_lv = meta["logvar_out_dim"]
    mu = out[:M, :n_mu]
    logvar = out[:M, n_mu:n_mu + n_lv]
    return mu, logvar


def encoder_forward_ref(params, x):
    """Pure-JAX reference for correctness checking."""
    w, b = params["in_fc"]
    h = jnp.maximum(x @ w + b, 0.0)
    for (w, b) in params["hidden"]:
        h = jnp.maximum(h @ w + b, 0.0)
    (w_mu, b_mu) = params["mu"]
    (w_lv, b_lv) = params["logvar"]
    return h @ w_mu + b_mu, h @ w_lv + b_lv


# ----------------------------- main ------------------------------------

if __name__ == "__main__":
    key = jax.random.PRNGKey(0)
    k_param, k_x, k_x2 = jax.random.split(key, 3)

    in_dim = 16
    hidden_layers = [32, 32]
    mu_out_dim = 8
    logvar_out_dim = 8

    params = init_encoder_params(
        k_param, in_dim, mu_out_dim, logvar_out_dim, hidden_layers)
    packed = pack_encoder_params(params)

    # Small (spec-sized) batch: single grid step, no wrapper-side padding at all.
    batch = 8
    x = jax.random.normal(k_x, (batch, in_dim), jnp.float32)
    mu, logvar = encoder_forward(packed, x)
    jax.block_until_ready((mu, logvar))
    mu_ref, logvar_ref = encoder_forward_ref(params, x)
    assert mu.shape == (batch, mu_out_dim)
    assert logvar.shape == (batch, logvar_out_dim)
    assert jnp.allclose(mu, mu_ref, atol=1e-5, rtol=1e-5)
    assert jnp.allclose(logvar, logvar_ref, atol=1e-5, rtol=1e-5)

    # Larger ragged batch: exercises the multi-step "parallel" grid (v7x megacore path)
    # and the batch-only padding.
    big = 1000
    x_big = jax.random.normal(k_x2, (big, in_dim), jnp.float32)
    mu_b, logvar_b = encoder_forward(packed, x_big)
    jax.block_until_ready((mu_b, logvar_b))
    mu_bref, logvar_bref = encoder_forward_ref(params, x_big)
    assert mu_b.shape == (big, mu_out_dim)
    assert logvar_b.shape == (big, logvar_out_dim)
    assert jnp.allclose(mu_b, mu_bref, atol=1e-4, rtol=1e-4)
    assert jnp.allclose(logvar_b, logvar_bref, atol=1e-4, rtol=1e-4)

    print("KERNEL_OK")
</pallas_src>

<mosaic_0001>
module attributes {stable_mosaic.version = 11 : i64} {
  func.func @_fused_mlp_kernel(%arg0: i32, %arg1: memref<8x16xf32, #tpu.memory_space<vmem>>, %arg2: memref<16x32xf32, #tpu.memory_space<vmem>>, %arg3: memref<1x32xf32, #tpu.memory_space<vmem>>, %arg4: memref<32x32xf32, #tpu.memory_space<vmem>>, %arg5: memref<1x32xf32, #tpu.memory_space<vmem>>, %arg6: memref<32x128xf32, #tpu.memory_space<vmem>>, %arg7: memref<1x128xf32, #tpu.memory_space<vmem>>, %arg8: memref<8x128xf32, #tpu.memory_space<vmem>>) attributes {dimension_semantics = [#tpu.dimension_semantics<parallel>], iteration_bounds = array<i64: 1>, scalar_prefetch = 0 : i64, scratch_operands = 0 : i64, tpu.core_type = #tpu.core_type<tc>, window_params = [{transform_indices = @transform_0, window_bounds = array<i64: 8, 16>}, {pipeline_mode = #tpu.pipeline_mode<synchronous>, transform_indices = @transform_1, window_bounds = array<i64: 16, 32>}, {pipeline_mode = #tpu.pipeline_mode<synchronous>, transform_indices = @transform_2, window_bounds = array<i64: 1, 32>}, {pipeline_mode = #tpu.pipeline_mode<synchronous>, transform_indices = @transform_3, window_bounds = array<i64: 32, 32>}, {pipeline_mode = #tpu.pipeline_mode<synchronous>, transform_indices = @transform_4, window_bounds = array<i64: 1, 32>}, {pipeline_mode = #tpu.pipeline_mode<synchronous>, transform_indices = @transform_5, window_bounds = array<i64: 32, 128>}, {pipeline_mode = #tpu.pipeline_mode<synchronous>, transform_indices = @transform_6, window_bounds = array<i64: 1, 128>}, {transform_indices = @transform_7, window_bounds = array<i64: 8, 128>}]} {
    %c0 = arith.constant 0 : index
    %c0_0 = arith.constant 0 : index
    %0 = vector.load %arg1[%c0, %c0_0] : memref<8x16xf32, #tpu.memory_space<vmem>>, vector<8x16xf32>
    %c0_1 = arith.constant 0 : index
    %c0_2 = arith.constant 0 : index
    %1 = vector.load %arg2[%c0_1, %c0_2] : memref<16x32xf32, #tpu.memory_space<vmem>>, vector<16x32xf32>
    %c0_3 = arith.constant 0 : index
    %c0_4 = arith.constant 0 : index
    %2 = vector.load %arg3[%c0_3, %c0_4] : memref<1x32xf32, #tpu.memory_space<vmem>>, vector<1x32xf32>
    %cst = arith.constant dense<0.000000e+00> : vector<8x32xf32>
    %3 = tpu.matmul %0, %1, %cst {dimension_numbers = #tpu.dot_dimension_numbers<[1], [0], [0], [1], [0, 0, 1, 1], [], []>} : vector<8x16xf32>, vector<16x32xf32>, vector<8x32xf32> -> vector<8x32xf32>
    %4 = vector.broadcast %2 : vector<1x32xf32> to vector<8x32xf32>
    %5 = arith.addf %3, %4 : vector<8x32xf32>
    %cst_5 = arith.constant 0.000000e+00 : f32
    %6 = vector.broadcast %cst_5 : f32 to vector<8x32xf32>
    %7 = arith.maximumf %5, %6 : vector<8x32xf32>
    %c0_6 = arith.constant 0 : index
    %c0_7 = arith.constant 0 : index
    %8 = vector.load %arg4[%c0_6, %c0_7] : memref<32x32xf32, #tpu.memory_space<vmem>>, vector<32x32xf32>
    %c0_8 = arith.constant 0 : index
    %c0_9 = arith.constant 0 : index
    %9 = vector.load %arg5[%c0_8, %c0_9] : memref<1x32xf32, #tpu.memory_space<vmem>>, vector<1x32xf32>
    %cst_10 = arith.constant dense<0.000000e+00> : vector<8x32xf32>
    %10 = tpu.matmul %7, %8, %cst_10 {dimension_numbers = #tpu.dot_dimension_numbers<[1], [0], [0], [1], [0, 0, 1, 1], [], []>} : vector<8x32xf32>, vector<32x32xf32>, vector<8x32xf32> -> vector<8x32xf32>
    %11 = vector.broadcast %9 : vector<1x32xf32> to vector<8x32xf32>
    %12 = arith.addf %10, %11 : vector<8x32xf32>
    %cst_11 = arith.constant 0.000000e+00 : f32
    %13 = vector.broadcast %cst_11 : f32 to vector<8x32xf32>
    %14 = arith.maximumf %12, %13 : vector<8x32xf32>
    %c0_12 = arith.constant 0 : index
    %c0_13 = arith.constant 0 : index
    %15 = vector.load %arg6[%c0_12, %c0_13] : memref<32x128xf32, #tpu.memory_space<vmem>>, vector<32x128xf32>
    %c0_14 = arith.constant 0 : index
    %c0_15 = arith.constant 0 : index
    %16 = vector.load %arg7[%c0_14, %c0_15] : memref<1x128xf32, #tpu.memory_space<vmem>>, vector<1x128xf32>
    %cst_16 = arith.constant dense<0.000000e+00> : vector<8x128xf32>
    %17 = tpu.matmul %14, %15, %cst_16 {dimension_numbers = #tpu.dot_dimension_numbers<[1], [0], [0], [1], [0, 0, 1, 1], [], []>} : vector<8x32xf32>, vector<32x128xf32>, vector<8x128xf32> -> vector<8x128xf32>
    %18 = vector.broadcast %16 : vector<1x128xf32> to vector<8x128xf32>
    %19 = arith.addf %17, %18 : vector<8x128xf32>
    %c0_17 = arith.constant 0 : index
    %c0_18 = arith.constant 0 : index
    %20 = vector.load %arg8[%c0_17, %c0_18] : memref<8x128xf32, #tpu.memory_space<vmem>>, vector<8x128xf32>
    tpu.vector_store %arg8[%c0_17, %c0_18], %19 {strides = array<i32>} : memref<8x128xf32, #tpu.memory_space<vmem>>, vector<8x128xf32>,
    return
  }
  func.func @transform_0(%arg0: i32) -> (i32, i32) {
    %c0_i32 = arith.constant 0 : i32
    %c0_i32_0 = arith.constant 0 : i32
    return %arg0, %c0_i32 : i32, i32
  }
  func.func @transform_1(%arg0: i32) -> (i32, i32) {
    %c0_i32 = arith.constant 0 : i32
    %c0_i32_0 = arith.constant 0 : i32
    %c0_i32_1 = arith.constant 0 : i32
    return %c0_i32, %c0_i32_0 : i32, i32
  }
  func.func @transform_2(%arg0: i32) -> (i32, i32) {
    %c0_i32 = arith.constant 0 : i32
    %c0_i32_0 = arith.constant 0 : i32
    %c0_i32_1 = arith.constant 0 : i32
    return %c0_i32, %c0_i32_0 : i32, i32
  }
  func.func @transform_3(%arg0: i32) -> (i32, i32) {
    %c0_i32 = arith.constant 0 : i32
    %c0_i32_0 = arith.constant 0 : i32
    %c0_i32_1 = arith.constant 0 : i32
    return %c0_i32, %c0_i32_0 : i32, i32
  }
  func.func @transform_4(%arg0: i32) -> (i32, i32) {
    %c0_i32 = arith.constant 0 : i32
    %c0_i32_0 = arith.constant 0 : i32
    %c0_i32_1 = arith.constant 0 : i32
    return %c0_i32, %c0_i32_0 : i32, i32
  }
  func.func @transform_5(%arg0: i32) -> (i32, i32) {
    %c0_i32 = arith.constant 0 : i32
    %c0_i32_0 = arith.constant 0 : i32
    %c0_i32_1 = arith.constant 0 : i32
    return %c0_i32, %c0_i32_0 : i32, i32
  }
  func.func @transform_6(%arg0: i32) -> (i32, i32) {
    %c0_i32 = arith.constant 0 : i32
    %c0_i32_0 = arith.constant 0 : i32
    %c0_i32_1 = arith.constant 0 : i32
    return %c0_i32, %c0_i32_0 : i32, i32
  }
  func.func @transform_7(%arg0: i32) -> (i32, i32) {
    %c0_i32 = arith.constant 0 : i32
    %c0_i32_0 = arith.constant 0 : i32
    return %arg0, %c0_i32 : i32, i32
  }
}

module attributes {stable_mosaic.version = 11 : i64} {
  func.func @_fused_mlp_kernel(%arg0: i32, %arg1: memref<8x16xf32, #tpu.memory_space<vmem>>, %arg2: memref<16x32xf32, #tpu.memory_space<vmem>>, %arg3: memref<1x32xf32, #tpu.memory_space<vmem>>, %arg4: memref<32x32xf32, #tpu.memory_space<vmem>>, %arg5: memref<1x32xf32, #tpu.memory_space<vmem>>, %arg6: memref<32x128xf32, #tpu.memory_space<vmem>>, %arg7: memref<1x128xf32, #tpu.memory_space<vmem>>, %arg8: memref<8x128xf32, #tpu.memory_space<vmem>>) attributes {dimension_semantics = [#tpu.dimension_semantics<parallel>], iteration_bounds = array<i64: 1>, scalar_prefetch = 0 : i64, scratch_operands = 0 : i64, tpu.core_type = #tpu.core_type<tc>, window_params = [{transform_indices = @transform_0, window_bounds = array<i64: 8, 16>}, {pipeline_mode = #tpu.pipeline_mode<synchronous>, transform_indices = @transform_1, window_bounds = array<i64: 16, 32>}, {pipeline_mode = #tpu.pipeline_mode<synchronous>, transform_indices = @transform_2, window_bounds = array<i64: 1, 32>}, {pipeline_mode = #tpu.pipeline_mode<synchronous>, transform_indices = @transform_3, window_bounds = array<i64: 32, 32>}, {pipeline_mode = #tpu.pipeline_mode<synchronous>, transform_indices = @transform_4, window_bounds = array<i64: 1, 32>}, {pipeline_mode = #tpu.pipeline_mode<synchronous>, transform_indices = @transform_5, window_bounds = array<i64: 32, 128>}, {pipeline_mode = #tpu.pipeline_mode<synchronous>, transform_indices = @transform_6, window_bounds = array<i64: 1, 128>}, {transform_indices = @transform_7, window_bounds = array<i64: 8, 128>}]} {
    %c0 = arith.constant 0 : index
    %c0_0 = arith.constant 0 : index
    %0 = vector.load %arg1[%c0, %c0_0] : memref<8x16xf32, #tpu.memory_space<vmem>>, vector<8x16xf32>
    %c0_1 = arith.constant 0 : index
    %c0_2 = arith.constant 0 : index
    %1 = vector.load %arg2[%c0_1, %c0_2] : memref<16x32xf32, #tpu.memory_space<vmem>>, vector<16x32xf32>
    %c0_3 = arith.constant 0 : index
    %c0_4 = arith.constant 0 : index
    %2 = vector.load %arg3[%c0_3, %c0_4] : memref<1x32xf32, #tpu.memory_space<vmem>>, vector<1x32xf32>
    %cst = arith.constant dense<0.000000e+00> : vector<8x32xf32>
    %3 = tpu.matmul %0, %1, %cst {dimension_numbers = #tpu.dot_dimension_numbers<[1], [0], [0], [1], [0, 0, 1, 1], [], []>} : vector<8x16xf32>, vector<16x32xf32>, vector<8x32xf32> -> vector<8x32xf32>
    %4 = vector.broadcast %2 : vector<1x32xf32> to vector<8x32xf32>
    %5 = arith.addf %3, %4 : vector<8x32xf32>
    %cst_5 = arith.constant 0.000000e+00 : f32
    %6 = vector.broadcast %cst_5 : f32 to vector<8x32xf32>
    %7 = arith.maximumf %5, %6 : vector<8x32xf32>
    %c0_6 = arith.constant 0 : index
    %c0_7 = arith.constant 0 : index
    %8 = vector.load %arg4[%c0_6, %c0_7] : memref<32x32xf32, #tpu.memory_space<vmem>>, vector<32x32xf32>
    %c0_8 = arith.constant 0 : index
    %c0_9 = arith.constant 0 : index
    %9 = vector.load %arg5[%c0_8, %c0_9] : memref<1x32xf32, #tpu.memory_space<vmem>>, vector<1x32xf32>
    %cst_10 = arith.constant dense<0.000000e+00> : vector<8x32xf32>
    %10 = tpu.matmul %7, %8, %cst_10 {dimension_numbers = #tpu.dot_dimension_numbers<[1], [0], [0], [1], [0, 0, 1, 1], [], []>} : vector<8x32xf32>, vector<32x32xf32>, vector<8x32xf32> -> vector<8x32xf32>
    %11 = vector.broadcast %9 : vector<1x32xf32> to vector<8x32xf32>
    %12 = arith.addf %10, %11 : vector<8x32xf32>
    %cst_11 = arith.constant 0.000000e+00 : f32
    %13 = vector.broadcast %cst_11 : f32 to vector<8x32xf32>
    %14 = arith.maximumf %12, %13 : vector<8x32xf32>
    %c0_12 = arith.constant 0 : index
    %c0_13 = arith.constant 0 : index
    %15 = vector.load %arg6[%c0_12, %c0_13] : memref<32x128xf32, #tpu.memory_space<vmem>>, vector<32x128xf32>
    %c0_14 = arith.constant 0 : index
    %c0_15 = arith.constant 0 : index
    %16 = vector.load %arg7[%c0_14, %c0_15] : memref<1x128xf32, #tpu.memory_space<vmem>>, vector<1x128xf32>
    %cst_16 = arith.constant dense<0.000000e+00> : vector<8x128xf32>
    %17 = tpu.matmul %14, %15, %cst_16 {dimension_numbers = #tpu.dot_dimension_numbers<[1], [0], [0], [1], [0, 0, 1, 1], [], []>} : vector<8x32xf32>, vector<32x128xf32>, vector<8x128xf32> -> vector<8x128xf32>
    %18 = vector.broadcast %16 : vector<1x128xf32> to vector<8x128xf32>
    %19 = arith.addf %17, %18 : vector<8x128xf32>
    %c0_17 = arith.constant 0 : index
    %c0_18 = arith.constant 0 : index
    %20 = vector.load %arg8[%c0_17, %c0_18] : memref<8x128xf32, #tpu.memory_space<vmem>>, vector<8x128xf32>
    tpu.vector_store %arg8[%c0_17, %c0_18], %19 {strides = array<i32>} : memref<8x128xf32, #tpu.memory_space<vmem>>, vector<8x128xf32>,
    return
  }
  func.func @transform_0(%arg0: i32) -> (i32, i32) {
    %c0_i32 = arith.constant 0 : i32
    %c0_i32_0 = arith.constant 0 : i32
    return %arg0, %c0_i32 : i32, i32
  }
  func.func @transform_1(%arg0: i32) -> (i32, i32) {
    %c0_i32 = arith.constant 0 : i32
    %c0_i32_0 = arith.constant 0 : i32
    %c0_i32_1 = arith.constant 0 : i32
    return %c0_i32, %c0_i32_0 : i32, i32
  }
  func.func @transform_2(%arg0: i32) -> (i32, i32) {
    %c0_i32 = arith.constant 0 : i32
    %c0_i32_0 = arith.constant 0 : i32
    %c0_i32_1 = arith.constant 0 : i32
    return %c0_i32, %c0_i32_0 : i32, i32
  }
  func.func @transform_3(%arg0: i32) -> (i32, i32) {
    %c0_i32 = arith.constant 0 : i32
    %c0_i32_0 = arith.constant 0 : i32
    %c0_i32_1 = arith.constant 0 : i32
    return %c0_i32, %c0_i32_0 : i32, i32
  }
  func.func @transform_4(%arg0: i32) -> (i32, i32) {
    %c0_i32 = arith.constant 0 : i32
    %c0_i32_0 = arith.constant 0 : i32
    %c0_i32_1 = arith.constant 0 : i32
    return %c0_i32, %c0_i32_0 : i32, i32
  }
  func.func @transform_5(%arg0: i32) -> (i32, i32) {
    %c0_i32 = arith.constant 0 : i32
    %c0_i32_0 = arith.constant 0 : i32
    %c0_i32_1 = arith.constant 0 : i32
    return %c0_i32, %c0_i32_0 : i32, i32
  }
  func.func @transform_6(%arg0: i32) -> (i32, i32) {
    %c0_i32 = arith.constant 0 : i32
    %c0_i32_0 = arith.constant 0 : i32
    %c0_i32_1 = arith.constant 0 : i32
    return %c0_i32, %c0_i32_0 : i32, i32
  }
  func.func @transform_7(%arg0: i32) -> (i32, i32) {
    %c0_i32 = arith.constant 0 : i32
    %c0_i32_0 = arith.constant 0 : i32
    return %arg0, %c0_i32 : i32, i32
  }
}

</mosaic_0001>

<llo_original>
// kernel: tpu_custom_call.1
$region0: #{tpu_custom_call.1}
  #allocation0 [shape = 'u32[]', space=smem, size = 0x4, offset = 0x4, fixed_abs, tag = 'smem constant byte address 0x4 - core index']
  #allocation1 [shape = 'u32[144,128]{1,0:T(1,128)}', space=vmem, size = 0x12000, scoped, tag = 'internal scratch']
  %s0 = inlined_call_operand.hbm [shape: f32[8,16], index: 0, kind: input, shape index: {}]
  %s1 = inlined_call_operand.hbm [shape: f32[16,32], index: 1, kind: input, shape index: {}]
  %s2 = inlined_call_operand.vmem [shape: f32[1,32], index: 2, kind: input, shape index: {}]
  %s3 = inlined_call_operand.hbm [shape: f32[32,32], index: 3, kind: input, shape index: {}]
  %s4 = inlined_call_operand.vmem [shape: f32[1,32], index: 4, kind: input, shape index: {}]
  %s5 = inlined_call_operand.hbm [shape: f32[32,128], index: 5, kind: input, shape index: {}]
  %s6 = inlined_call_operand.vmem [shape: f32[1,128], index: 6, kind: input, shape index: {}]
  %s7 = inlined_call_operand.hbm [shape: f32[8,128], index: 7, kind: output, shape index: {}]
  %s8 = sld [smem:[#allocation0]]
  $region54: #{tpu_custom_call.1} parent=0
    _
  %s10 = ssub.s32 1, %s8
  %s11 = scalar_select 0, %s10, %s8
  $region1: #{tpu_custom_call.1} parent=0
    #allocation2 [shape = 'u8[4096]{0}', space=vmem, size = 0x1000, scoped, tag = 'input window, operand 0, single buffered']
    #allocation3 [shape = 's32[1]{0}', space=sflag, size = 0x4, scoped, tag = 'scoped memory for tpu_custom_call.1']
    #allocation4 [shape = 's32[1]{0}', space=sflag, size = 0x4, scoped, tag = 'scoped memory for tpu_custom_call.1']
    #allocation5 [shape = 'u8[8192]{0}', space=vmem, size = 0x2000, scoped, tag = 'input window, operand 1, single buffered']
    #allocation6 [shape = 's32[1]{0}', space=sflag, size = 0x4, scoped, tag = 'scoped memory for tpu_custom_call.1']
    #allocation7 [shape = 'u8[16384]{0}', space=vmem, size = 0x4000, scoped, tag = 'input window, operand 3, single buffered']
    #allocation8 [shape = 'u8[16384]{0}', space=vmem, size = 0x4000, scoped, tag = 'input window, operand 5, single buffered']
    #allocation9 [shape = 's32[1]{0}', space=sflag, size = 0x4, scoped, tag = 'scoped memory for tpu_custom_call.1']
    #allocation10 [shape = 'u8[4096]{0}', space=vmem, size = 0x1000, scoped, tag = 'output window, operand 0, single buffered']
    %12 = vsyncpa [#allocation3], 0
    %13 = vsyncpa [#allocation6], 0
    %14 = vsyncpa [#allocation9], 0
    %15 = vsyncpa [#allocation4], 0
    // Predicated region
    $region2: #{tpu_custom_call.1} parent=1 // pred_check
      _
    $region3: #{tpu_custom_call.1} parent=1 // pred_check_branch
      %17 = sbr.rel (0) target = $region5
    $region4: #{tpu_custom_call.1} parent=1 // pred_region
      %s19 = ssub.s32 128, 128
      %20 = vsyncadd [#allocation3], %s19
      %s22 = sshll.u32 [#allocation2], 4
      %s23 = int_to_ptr.vmem [resolvable:$true] %s22
      %25 = dma.hbm_to_vmem [thread:$0]  %s0, 128, %s23, [#allocation3]
    $region5: #{tpu_custom_call.1} parent=1 // pred_fallthru
      _
    // Predicated region
    $region6: #{tpu_custom_call.1} parent=1 // pred_check
      _
    $region7: #{tpu_custom_call.1} parent=1 // pred_check_branch
      %27 = sbr.rel (0) target = $region9
    $region8: #{tpu_custom_call.1} parent=1 // pred_region
      %s29 = ssub.s32 256, 256
      %30 = vsyncadd [#allocation6], %s29
      %s31 = sshll.u32 [#allocation5], 4
      %s32 = int_to_ptr.vmem [resolvable:$true] %s31
      %37 = dma.hbm_to_vmem [thread:$0]  %s1, 256, %s32, [#allocation6], 128, 128, 8
    $region9: #{tpu_custom_call.1} parent=1 // pred_fallthru
      _
    // Predicated region
    $region10: #{tpu_custom_call.1} parent=1 // pred_check
      _
    $region11: #{tpu_custom_call.1} parent=1 // pred_check_branch
      %39 = sbr.rel (0) target = $region13
    $region12: #{tpu_custom_call.1} parent=1 // pred_region
      _
    $region13: #{tpu_custom_call.1} parent=1 // pred_fallthru
      _
    // Predicated region
    $region14: #{tpu_custom_call.1} parent=1 // pred_check
      _
    $region15: #{tpu_custom_call.1} parent=1 // pred_check_branch
      %41 = sbr.rel (0) target = $region17
    $region16: #{tpu_custom_call.1} parent=1 // pred_region
      %s43 = ssub.s32 512, 512
      %44 = vsyncadd [#allocation6], %s43
      %s45 = sshll.u32 [#allocation7], 4
      %s46 = int_to_ptr.vmem [resolvable:$true] %s45
      %51 = dma.hbm_to_vmem [thread:$0]  %s3, 512, %s46, [#allocation6], 128, 128, 8
    $region17: #{tpu_custom_call.1} parent=1 // pred_fallthru
      _
    // Predicated region
    $region18: #{tpu_custom_call.1} parent=1 // pred_check
      _
    $region19: #{tpu_custom_call.1} parent=1 // pred_check_branch
      %53 = sbr.rel (0) target = $region21
    $region20: #{tpu_custom_call.1} parent=1 // pred_region
      _
    $region21: #{tpu_custom_call.1} parent=1 // pred_fallthru
      _
    // Predicated region
    $region22: #{tpu_custom_call.1} parent=1 // pred_check
      _
    $region23: #{tpu_custom_call.1} parent=1 // pred_check_branch
      %55 = sbr.rel (0) target = $region25
    $region24: #{tpu_custom_call.1} parent=1 // pred_region
      %s57 = ssub.s32 512, 512
      %58 = vsyncadd [#allocation9], %s57
      %s59 = sshll.u32 [#allocation8], 4
      %s60 = int_to_ptr.vmem [resolvable:$true] %s59
      %65 = dma.hbm_to_vmem [thread:$0]  %s5, 512, %s60, [#allocation9], 128, 128, 8
    $region25: #{tpu_custom_call.1} parent=1 // pred_fallthru
      _
    // Predicated region
    $region26: #{tpu_custom_call.1} parent=1 // pred_check
      _
    $region27: #{tpu_custom_call.1} parent=1 // pred_check_branch
      %67 = sbr.rel (0) target = $region29
    $region28: #{tpu_custom_call.1} parent=1 // pred_region
      _
    $region29: #{tpu_custom_call.1} parent=1 // pred_fallthru
      _
    // Predicated region
    $region30: #{tpu_custom_call.1} parent=1 // pred_check
      _
    $region31: #{tpu_custom_call.1} parent=1 // pred_check_branch
      %69 = sbr.rel (0) target = $region33
    $region32: #{tpu_custom_call.1} parent=1 // pred_region
      %70 = dma.done [#allocation3], 128
    $region33: #{tpu_custom_call.1} parent=1 // pred_fallthru
      _
    // Predicated region
    $region34: #{tpu_custom_call.1} parent=1 // pred_check
      _
    $region35: #{tpu_custom_call.1} parent=1 // pred_check_branch
      %72 = sbr.rel (0) target = $region37
    $region36: #{tpu_custom_call.1} parent=1 // pred_region
      %73 = dma.done [#allocation6], 256
    $region37: #{tpu_custom_call.1} parent=1 // pred_fallthru
      _
    // Predicated region
    $region38: #{tpu_custom_call.1} parent=1 // pred_check
      _
    $region39: #{tpu_custom_call.1} parent=1 // pred_check_branch
      %75 = sbr.rel (0) target = $region41
    $region40: #{tpu_custom_call.1} parent=1 // pred_region
      %76 = dma.done [#allocation6], 512
    $region41: #{tpu_custom_call.1} parent=1 // pred_fallthru
      _
    // Predicated region
    $region42: #{tpu_custom_call.1} parent=1 // pred_check
      _
    $region43: #{tpu_custom_call.1} parent=1 // pred_check_branch
      %78 = sbr.rel (0) target = $region45
    $region44: #{tpu_custom_call.1} parent=1 // pred_region
      %79 = dma.done [#allocation9], 512
    $region45: #{tpu_custom_call.1} parent=1 // pred_fallthru
      _
    %v80 = vld [vmem:[#allocation2] sm:$0xff]
    %v81 = vld [vmem:[#allocation5] sm:$0xff]
    %v82 = vld [vmem:[#allocation5 + $0x8] sm:$0xff]
    %v83 = vld [vmem:[%s2] sm:$0x1]
    %v85 = vlaneseq
    %v86 = vshrl.u32 %v85, 7
    %v87 = vsub.s32 0, %v86
    %v88 = vrot.slane %v83, %v87
    %vm90 = vcmask 130048
    %v92 = vsel %vm90, %v80, 0
    %94 = vmatprep.subr.mxu0 0.0
    %95 = vmatpush1.msra.mxu0 %v81
    %96 = vmatprep.subr.mxu0 0.0
    %97 = vmatpush1.msra.mxu0 %v82
    %98 = vmatprep.subr.mxu0 0.0
    %99 = vmatpush1.msra.mxu0 0.0
    %100 = vmatprep.subr.mxu0 0.0
    %101 = vmatpush1.msra.mxu0 0.0
    %102 = vmatprep.subr.mxu0 0.0
    %103 = vmatpush1.msra.mxu0 0.0
    %104 = vmatprep.subr.mxu0 0.0
    %105 = vmatpush1.msra.mxu0 0.0
    %106 = vmatprep.subr.mxu0 0.0
    %107 = vmatpush1.msra.mxu0 0.0
    %108 = vmatprep.subr.mxu0 0.0
    %109 = vmatpush1.msra.mxu0 0.0
    %110 = vmatprep.subr.mxu0 0.0
    %111 = vmatpush1.msra.mxu0 0.0
    %112 = vmatprep.subr.mxu0 0.0
    %113 = vmatpush1.msra.mxu0 0.0
    %114 = vmatprep.subr.mxu0 0.0
    %115 = vmatpush1.msra.mxu0 0.0
    %116 = vmatprep.subr.mxu0 0.0
    %117 = vmatpush1.msra.mxu0 0.0
    %118 = vmatprep.subr.mxu0 0.0
    %119 = vmatpush1.msra.mxu0 0.0
    %120 = vmatprep.subr.mxu0 0.0
    %121 = vmatpush1.msra.mxu0 0.0
    %122 = vmatprep.subr.mxu0 0.0
    %123 = vmatpush1.msra.mxu0 0.0
    %124 = vmatprep.subr.mxu0 0.0
    %125 = vmatpush1.msra.mxu0 0.0
    %126 = vmatprep.subr.mxu0 0.0
    %127 = vmatpush1.msra.mxu0 0.0
    %128 = vmatprep.subr.mxu0 0.0
    %129 = vmatpush1.msra.mxu0 0.0
    %130 = vmatprep.subr.mxu0 0.0
    %131 = vmatpush1.msra.mxu0 0.0
    %132 = vmatprep.subr.mxu0 0.0
    %133 = vmatpush1.msra.mxu0 0.0
    %134 = vmatprep.subr.mxu0 0.0
    %135 = vmatpush1.msra.mxu0 0.0
    %136 = vmatprep.subr.mxu0 0.0
    %137 = vmatpush1.msra.mxu0 0.0
    %138 = vmatprep.subr.mxu0 0.0
    %139 = vmatpush1.msra.mxu0 0.0
    %140 = vmatprep.subr.mxu0 0.0
    %141 = vmatpush1.msra.mxu0 0.0
    %142 = vmatprep.subr.mxu0 0.0
    %143 = vmatpush1.msra.mxu0 0.0
    %144 = vmatprep.subr.mxu0 0.0
    %145 = vmatpush1.msra.mxu0 0.0
    %146 = vmatprep.subr.mxu0 0.0
    %147 = vmatpush1.msra.mxu0 0.0
    %148 = vmatprep.subr.mxu0 0.0
    %149 = vmatpush1.msra.mxu0 0.0
    %150 = vmatprep.subr.mxu0 0.0
    %151 = vmatpush1.msra.mxu0 0.0
    %152 = vmatprep.subr.mxu0 0.0
    %153 = vmatpush1.msra.mxu0 0.0
    %154 = vmatprep.subr.mxu0 0.0
    %155 = vmatpush1.msra.mxu0 0.0
    %156 = vmatprep.subr.mxu0 0.0
    %157 = vmatpush1.msra.mxu0 0.0
    %158 = vmatprep.mubr.f32.mxu0 0.0
    %159 = vmatmul.mubr.f32.gmra.mrb[0].mxu0 %v92
    %v160 = vpop.f32.mrb[0].mxu0
    %v161 = vadd.f32 %v88, %v160
    %v162 = vpop.f32.mrb[0].mxu0
    %163 = vdwg.mxu0
    %v164 = vmax.f32 %v161, 0.0
    %v165 = vld [vmem:[#allocation7] sm:$0xff]
    %v166 = vld [vmem:[#allocation7 + $0x8] sm:$0xff]
    %v167 = vld [vmem:[#allocation7 + $0x10] sm:$0xff]
    %v168 = vld [vmem:[#allocation7 + $0x18] sm:$0xff]
    %v169 = vld [vmem:[%s4] sm:$0x1]
    %v171 = vlaneseq
    %v172 = vshrl.u32 %v171, 7
    %v173 = vsub.s32 0, %v172
    %v174 = vrot.slane %v169, %v173
    %vm176 = vcmask 261120
    %v178 = vsel %vm176, %v164, 0
    %180 = vmatprep.subr.mxu0 0.0
    %181 = vmatpush1.msra.mxu0 %v165
    %182 = vmatprep.subr.mxu0 0.0
    %183 = vmatpush1.msra.mxu0 %v166
    %184 = vmatprep.subr.mxu0 0.0
    %185 = vmatpush1.msra.mxu0 %v167
    %186 = vmatprep.subr.mxu0 0.0
    %187 = vmatpush1.msra.mxu0 %v168
    %188 = vmatprep.subr.mxu0 0.0
    %189 = vmatpush1.msra.mxu0 0.0
    %190 = vmatprep.subr.mxu0 0.0
    %191 = vmatpush1.msra.mxu0 0.0
    %192 = vmatprep.subr.mxu0 0.0
    %193 = vmatpush1.msra.mxu0 0.0
    %194 = vmatprep.subr.mxu0 0.0
    %195 = vmatpush1.msra.mxu0 0.0
    %196 = vmatprep.subr.mxu0 0.0
    %197 = vmatpush1.msra.mxu0 0.0
    %198 = vmatprep.subr.mxu0 0.0
    %199 = vmatpush1.msra.mxu0 0.0
    %200 = vmatprep.subr.mxu0 0.0
    %201 = vmatpush1.msra.mxu0 0.0
    %202 = vmatprep.subr.mxu0 0.0
    %203 = vmatpush1.msra.mxu0 0.0
    %204 = vmatprep.subr.mxu0 0.0
    %205 = vmatpush1.msra.mxu0 0.0
    %206 = vmatprep.subr.mxu0 0.0
    %207 = vmatpush1.msra.mxu0 0.0
    %208 = vmatprep.subr.mxu0 0.0
    %209 = vmatpush1.msra.mxu0 0.0
    %210 = vmatprep.subr.mxu0 0.0
    %211 = vmatpush1.msra.mxu0 0.0
    %212 = vmatprep.subr.mxu0 0.0
    %213 = vmatpush1.msra.mxu0 0.0
    %214 = vmatprep.subr.mxu0 0.0
    %215 = vmatpush1.msra.mxu0 0.0
    %216 = vmatprep.subr.mxu0 0.0
    %217 = vmatpush1.msra.mxu0 0.0
    %218 = vmatprep.subr.mxu0 0.0
    %219 = vmatpush1.msra.mxu0 0.0
    %220 = vmatprep.subr.mxu0 0.0
    %221 = vmatpush1.msra.mxu0 0.0
    %222 = vmatprep.subr.mxu0 0.0
    %223 = vmatpush1.msra.mxu0 0.0
    %224 = vmatprep.subr.mxu0 0.0
    %225 = vmatpush1.msra.mxu0 0.0
    %226 = vmatprep.subr.mxu0 0.0
    %227 = vmatpush1.msra.mxu0 0.0
    %228 = vmatprep.subr.mxu0 0.0
    %229 = vmatpush1.msra.mxu0 0.0
    %230 = vmatprep.subr.mxu0 0.0
    %231 = vmatpush1.msra.mxu0 0.0
    %232 = vmatprep.subr.mxu0 0.0
    %233 = vmatpush1.msra.mxu0 0.0
    %234 = vmatprep.subr.mxu0 0.0
    %235 = vmatpush1.msra.mxu0 0.0
    %236 = vmatprep.subr.mxu0 0.0
    %237 = vmatpush1.msra.mxu0 0.0
    %238 = vmatprep.subr.mxu0 0.0
    %239 = vmatpush1.msra.mxu0 0.0
    %240 = vmatprep.subr.mxu0 0.0
    %241 = vmatpush1.msra.mxu0 0.0
    %242 = vmatprep.subr.mxu0 0.0
    %243 = vmatpush1.msra.mxu0 0.0
    %244 = vmatprep.mubr.f32.mxu0 0.0
    %245 = vmatmul.mubr.f32.gmra.mrb[0].mxu0 %v178
    %v246 = vpop.f32.mrb[0].mxu0
    %v247 = vadd.f32 %v174, %v246
    %v248 = vpop.f32.mrb[0].mxu0
    %249 = vdwg.mxu0
    %v250 = vmax.f32 %v247, 0.0
    %v251 = vld [vmem:[#allocation8] sm:$0xff]
    %v252 = vld [vmem:[#allocation8 + $0x8] sm:$0xff]
    %v253 = vld [vmem:[#allocation8 + $0x10] sm:$0xff]
    %v254 = vld [vmem:[#allocation8 + $0x18] sm:$0xff]
    %v255 = vld [vmem:[%s6] sm:$0x1]
    %v257 = vlaneseq
    %v258 = vshrl.u32 %v257, 7
    %v259 = vsub.s32 0, %v258
    %v260 = vrot.slane %v255, %v259
    %v263 = vsel %vm176, %v250, 0
    %265 = vmatprep.subr.mxu0 0.0
    %266 = vmatpush1.msra.mxu0 %v251
    %267 = vmatprep.subr.mxu0 0.0
    %268 = vmatpush1.msra.mxu0 %v252
    %269 = vmatprep.subr.mxu0 0.0
    %270 = vmatpush1.msra.mxu0 %v253
    %271 = vmatprep.subr.mxu0 0.0
    %272 = vmatpush1.msra.mxu0 %v254
    %273 = vmatprep.subr.mxu0 0.0
    %274 = vmatpush1.msra.mxu0 0.0
    %275 = vmatprep.subr.mxu0 0.0
    %276 = vmatpush1.msra.mxu0 0.0
    %277 = vmatprep.subr.mxu0 0.0
    %278 = vmatpush1.msra.mxu0 0.0
    %279 = vmatprep.subr.mxu0 0.0
    %280 = vmatpush1.msra.mxu0 0.0
    %281 = vmatprep.subr.mxu0 0.0
    %282 = vmatpush1.msra.mxu0 0.0
    %283 = vmatprep.subr.mxu0 0.0
    %284 = vmatpush1.msra.mxu0 0.0
    %285 = vmatprep.subr.mxu0 0.0
    %286 = vmatpush1.msra.mxu0 0.0
    %287 = vmatprep.subr.mxu0 0.0
    %288 = vmatpush1.msra.mxu0 0.0
    %289 = vmatprep.subr.mxu0 0.0
    %290 = vmatpush1.msra.mxu0 0.0
    %291 = vmatprep.subr.mxu0 0.0
    %292 = vmatpush1.msra.mxu0 0.0
    %293 = vmatprep.subr.mxu0 0.0
    %294 = vmatpush1.msra.mxu0 0.0
    %295 = vmatprep.subr.mxu0 0.0
    %296 = vmatpush1.msra.mxu0 0.0
    %297 = vmatprep.subr.mxu0 0.0
    %298 = vmatpush1.msra.mxu0 0.0
    %299 = vmatprep.subr.mxu0 0.0
    %300 = vmatpush1.msra.mxu0 0.0
    %301 = vmatprep.subr.mxu0 0.0
    %302 = vmatpush1.msra.mxu0 0.0
    %303 = vmatprep.subr.mxu0 0.0
    %304 = vmatpush1.msra.mxu0 0.0
    %305 = vmatprep.subr.mxu0 0.0
    %306 = vmatpush1.msra.mxu0 0.0
    %307 = vmatprep.subr.mxu0 0.0
    %308 = vmatpush1.msra.mxu0 0.0
    %309 = vmatprep.subr.mxu0 0.0
    %310 = vmatpush1.msra.mxu0 0.0
    %311 = vmatprep.subr.mxu0 0.0
    %312 = vmatpush1.msra.mxu0 0.0
    %313 = vmatprep.subr.mxu0 0.0
    %314 = vmatpush1.msra.mxu0 0.0
    %315 = vmatprep.subr.mxu0 0.0
    %316 = vmatpush1.msra.mxu0 0.0
    %317 = vmatprep.subr.mxu0 0.0
    %318 = vmatpush1.msra.mxu0 0.0
    %319 = vmatprep.subr.mxu0 0.0
    %320 = vmatpush1.msra.mxu0 0.0
    %321 = vmatprep.subr.mxu0 0.0
    %322 = vmatpush1.msra.mxu0 0.0
    %323 = vmatprep.subr.mxu0 0.0
    %324 = vmatpush1.msra.mxu0 0.0
    %325 = vmatprep.subr.mxu0 0.0
    %326 = vmatpush1.msra.mxu0 0.0
    %327 = vmatprep.subr.mxu0 0.0
    %328 = vmatpush1.msra.mxu0 0.0
    %329 = vmatprep.mubr.f32.mxu0 0.0
    %330 = vmatmul.mubr.f32.gmra.mrb[0].mxu0 %v263
    %v331 = vpop.f32.mrb[0].mxu0
    %v332 = vadd.f32 %v260, %v331
    %v333 = vpop.f32.mrb[0].mxu0
    %334 = vdwg.mxu0
    %335 = vst [vmem:[#allocation10] sm:$0xff] %v332
    // Predicated region
    $region46: #{tpu_custom_call.1} parent=1 // pred_check
      _
    $region47: #{tpu_custom_call.1} parent=1 // pred_check_branch
      %337 = sbr.rel (0) target = $region49
    $region48: #{tpu_custom_call.1} parent=1 // pred_region
      %s339 = ssub.s32 128, 128
      %340 = vsyncadd [#allocation4], %s339
      %s342 = sshll.u32 [#allocation10], 4
      %s343 = int_to_ptr.vmem [resolvable:$true] %s342
      %345 = dma.vmem_to_hbm [thread:$0]  %s343, 128, %s7, [#allocation4]
    $region49: #{tpu_custom_call.1} parent=1 // pred_fallthru
      _
    // Predicated region
    $region50: #{tpu_custom_call.1} parent=1 // pred_check
      _
    $region51: #{tpu_custom_call.1} parent=1 // pred_check_branch
      %347 = sbr.rel (0) target = $region53
    $region52: #{tpu_custom_call.1} parent=1 // pred_region
      %348 = dma.done [#allocation4], 128
    $region53: #{tpu_custom_call.1} parent=1 // pred_fallthru
      _
    %349 = vsyncpa [#allocation3], 1
    %350 = vsyncpa [#allocation6], 1
    %351 = vsyncpa [#allocation9], 1
    %352 = vsyncpa [#allocation4], 1

// kernel: tpu_custom_call.1
$region0: #{tpu_custom_call.1}
  #allocation0 [shape = 'u32[]', space=smem, size = 0x4, offset = 0x4, fixed_abs, tag = 'smem constant byte address 0x4 - core index']
  #allocation1 [shape = 'u32[144,128]{1,0:T(1,128)}', space=vmem, size = 0x12000, scoped, tag = 'internal scratch']
  %s0 = inlined_call_operand.hbm [shape: f32[8,16], index: 0, kind: input, shape index: {}]
  %s1 = inlined_call_operand.hbm [shape: f32[16,32], index: 1, kind: input, shape index: {}]
  %s2 = inlined_call_operand.vmem [shape: f32[1,32], index: 2, kind: input, shape index: {}]
  %s3 = inlined_call_operand.hbm [shape: f32[32,32], index: 3, kind: input, shape index: {}]
  %s4 = inlined_call_operand.vmem [shape: f32[1,32], index: 4, kind: input, shape index: {}]
  %s5 = inlined_call_operand.hbm [shape: f32[32,128], index: 5, kind: input, shape index: {}]
  %s6 = inlined_call_operand.vmem [shape: f32[1,128], index: 6, kind: input, shape index: {}]
  %s7 = inlined_call_operand.hbm [shape: f32[8,128], index: 7, kind: output, shape index: {}]
  %s8 = sld [smem:[#allocation0]]
  $region54: #{tpu_custom_call.1} parent=0
    _
  %s10 = ssub.s32 1, %s8
  %s11 = scalar_select 0, %s10, %s8
  $region1: #{tpu_custom_call.1} parent=0
    #allocation2 [shape = 'u8[4096]{0}', space=vmem, size = 0x1000, scoped, tag = 'input window, operand 0, single buffered']
    #allocation3 [shape = 's32[1]{0}', space=sflag, size = 0x4, scoped, tag = 'scoped memory for tpu_custom_call.1']
    #allocation4 [shape = 's32[1]{0}', space=sflag, size = 0x4, scoped, tag = 'scoped memory for tpu_custom_call.1']
    #allocation5 [shape = 'u8[8192]{0}', space=vmem, size = 0x2000, scoped, tag = 'input window, operand 1, single buffered']
    #allocation6 [shape = 's32[1]{0}', space=sflag, size = 0x4, scoped, tag = 'scoped memory for tpu_custom_call.1']
    #allocation7 [shape = 'u8[16384]{0}', space=vmem, size = 0x4000, scoped, tag = 'input window, operand 3, single buffered']
    #allocation8 [shape = 'u8[16384]{0}', space=vmem, size = 0x4000, scoped, tag = 'input window, operand 5, single buffered']
    #allocation9 [shape = 's32[1]{0}', space=sflag, size = 0x4, scoped, tag = 'scoped memory for tpu_custom_call.1']
    #allocation10 [shape = 'u8[4096]{0}', space=vmem, size = 0x1000, scoped, tag = 'output window, operand 0, single buffered']
    %12 = vsyncpa [#allocation3], 0
    %13 = vsyncpa [#allocation6], 0
    %14 = vsyncpa [#allocation9], 0
    %15 = vsyncpa [#allocation4], 0
    // Predicated region
    $region2: #{tpu_custom_call.1} parent=1 // pred_check
      _
    $region3: #{tpu_custom_call.1} parent=1 // pred_check_branch
      %17 = sbr.rel (0) target = $region5
    $region4: #{tpu_custom_call.1} parent=1 // pred_region
      %s19 = ssub.s32 128, 128
      %20 = vsyncadd [#allocation3], %s19
      %s22 = sshll.u32 [#allocation2], 4
      %s23 = int_to_ptr.vmem [resolvable:$true] %s22
      %25 = dma.hbm_to_vmem [thread:$0]  %s0, 128, %s23, [#allocation3]
    $region5: #{tpu_custom_call.1} parent=1 // pred_fallthru
      _
    // Predicated region
    $region6: #{tpu_custom_call.1} parent=1 // pred_check
      _
    $region7: #{tpu_custom_call.1} parent=1 // pred_check_branch
      %27 = sbr.rel (0) target = $region9
    $region8: #{tpu_custom_call.1} parent=1 // pred_region
      %s29 = ssub.s32 256, 256
      %30 = vsyncadd [#allocation6], %s29
      %s31 = sshll.u32 [#allocation5], 4
      %s32 = int_to_ptr.vmem [resolvable:$true] %s31
      %37 = dma.hbm_to_vmem [thread:$0]  %s1, 256, %s32, [#allocation6], 128, 128, 8
    $region9: #{tpu_custom_call.1} parent=1 // pred_fallthru
      _
    // Predicated region
    $region10: #{tpu_custom_call.1} parent=1 // pred_check
      _
    $region11: #{tpu_custom_call.1} parent=1 // pred_check_branch
      %39 = sbr.rel (0) target = $region13
    $region12: #{tpu_custom_call.1} parent=1 // pred_region
      _
    $region13: #{tpu_custom_call.1} parent=1 // pred_fallthru
      _
    // Predicated region
    $region14: #{tpu_custom_call.1} parent=1 // pred_check
      _
    $region15: #{tpu_custom_call.1} parent=1 // pred_check_branch
      %41 = sbr.rel (0) target = $region17
    $region16: #{tpu_custom_call.1} parent=1 // pred_region
      %s43 = ssub.s32 512, 512
      %44 = vsyncadd [#allocation6], %s43
      %s45 = sshll.u32 [#allocation7], 4
      %s46 = int_to_ptr.vmem [resolvable:$true] %s45
      %51 = dma.hbm_to_vmem [thread:$0]  %s3, 512, %s46, [#allocation6], 128, 128, 8
    $region17: #{tpu_custom_call.1} parent=1 // pred_fallthru
      _
    // Predicated region
    $region18: #{tpu_custom_call.1} parent=1 // pred_check
      _
    $region19: #{tpu_custom_call.1} parent=1 // pred_check_branch
      %53 = sbr.rel (0) target = $region21
    $region20: #{tpu_custom_call.1} parent=1 // pred_region
      _
    $region21: #{tpu_custom_call.1} parent=1 // pred_fallthru
      _
    // Predicated region
    $region22: #{tpu_custom_call.1} parent=1 // pred_check
      _
    $region23: #{tpu_custom_call.1} parent=1 // pred_check_branch
      %55 = sbr.rel (0) target = $region25
    $region24: #{tpu_custom_call.1} parent=1 // pred_region
      %s57 = ssub.s32 512, 512
      %58 = vsyncadd [#allocation9], %s57
      %s59 = sshll.u32 [#allocation8], 4
      %s60 = int_to_ptr.vmem [resolvable:$true] %s59
      %65 = dma.hbm_to_vmem [thread:$0]  %s5, 512, %s60, [#allocation9], 128, 128, 8
    $region25: #{tpu_custom_call.1} parent=1 // pred_fallthru
      _
    // Predicated region
    $region26: #{tpu_custom_call.1} parent=1 // pred_check
      _
    $region27: #{tpu_custom_call.1} parent=1 // pred_check_branch
      %67 = sbr.rel (0) target = $region29
    $region28: #{tpu_custom_call.1} parent=1 // pred_region
      _
    $region29: #{tpu_custom_call.1} parent=1 // pred_fallthru
      _
    // Predicated region
    $region30: #{tpu_custom_call.1} parent=1 // pred_check
      _
    $region31: #{tpu_custom_call.1} parent=1 // pred_check_branch
      %69 = sbr.rel (0) target = $region33
    $region32: #{tpu_custom_call.1} parent=1 // pred_region
      %70 = dma.done [#allocation3], 128
    $region33: #{tpu_custom_call.1} parent=1 // pred_fallthru
      _
    // Predicated region
    $region34: #{tpu_custom_call.1} parent=1 // pred_check
      _
    $region35: #{tpu_custom_call.1} parent=1 // pred_check_branch
      %72 = sbr.rel (0) target = $region37
    $region36: #{tpu_custom_call.1} parent=1 // pred_region
      %73 = dma.done [#allocation6], 256
    $region37: #{tpu_custom_call.1} parent=1 // pred_fallthru
      _
    // Predicated region
    $region38: #{tpu_custom_call.1} parent=1 // pred_check
      _
    $region39: #{tpu_custom_call.1} parent=1 // pred_check_branch
      %75 = sbr.rel (0) target = $region41
    $region40: #{tpu_custom_call.1} parent=1 // pred_region
      %76 = dma.done [#allocation6], 512
    $region41: #{tpu_custom_call.1} parent=1 // pred_fallthru
      _
    // Predicated region
    $region42: #{tpu_custom_call.1} parent=1 // pred_check
      _
    $region43: #{tpu_custom_call.1} parent=1 // pred_check_branch
      %78 = sbr.rel (0) target = $region45
    $region44: #{tpu_custom_call.1} parent=1 // pred_region
      %79 = dma.done [#allocation9], 512
    $region45: #{tpu_custom_call.1} parent=1 // pred_fallthru
      _
    %v80 = vld [vmem:[#allocation2] sm:$0xff]
    %v81 = vld [vmem:[#allocation5] sm:$0xff]
    %v82 = vld [vmem:[#allocation5 + $0x8] sm:$0xff]
    %v83 = vld [vmem:[%s2] sm:$0x1]
    %v85 = vlaneseq
    %v86 = vshrl.u32 %v85, 7
    %v87 = vsub.s32 0, %v86
    %v88 = vrot.slane %v83, %v87
    %vm90 = vcmask 130048
    %v92 = vsel %vm90, %v80, 0
    %94 = vmatprep.subr.mxu0 0.0
    %95 = vmatpush1.msra.mxu0 %v81
    %96 = vmatprep.subr.mxu0 0.0
    %97 = vmatpush1.msra.mxu0 %v82
    %98 = vmatprep.subr.mxu0 0.0
    %99 = vmatpush1.msra.mxu0 0.0
    %100 = vmatprep.subr.mxu0 0.0
    %101 = vmatpush1.msra.mxu0 0.0
    %102 = vmatprep.subr.mxu0 0.0
    %103 = vmatpush1.msra.mxu0 0.0
    %104 = vmatprep.subr.mxu0 0.0
    %105 = vmatpush1.msra.mxu0 0.0
    %106 = vmatprep.subr.mxu0 0.0
    %107 = vmatpush1.msra.mxu0 0.0
    %108 = vmatprep.subr.mxu0 0.0
    %109 = vmatpush1.msra.mxu0 0.0
    %110 = vmatprep.subr.mxu0 0.0
    %111 = vmatpush1.msra.mxu0 0.0
    %112 = vmatprep.subr.mxu0 0.0
    %113 = vmatpush1.msra.mxu0 0.0
    %114 = vmatprep.subr.mxu0 0.0
    %115 = vmatpush1.msra.mxu0 0.0
    %116 = vmatprep.subr.mxu0 0.0
    %117 = vmatpush1.msra.mxu0 0.0
    %118 = vmatprep.subr.mxu0 0.0
    %119 = vmatpush1.msra.mxu0 0.0
    %120 = vmatprep.subr.mxu0 0.0
    %121 = vmatpush1.msra.mxu0 0.0
    %122 = vmatprep.subr.mxu0 0.0
    %123 = vmatpush1.msra.mxu0 0.0
    %124 = vmatprep.subr.mxu0 0.0
    %125 = vmatpush1.msra.mxu0 0.0
    %126 = vmatprep.subr.mxu0 0.0
    %127 = vmatpush1.msra.mxu0 0.0
    %128 = vmatprep.subr.mxu0 0.0
    %129 = vmatpush1.msra.mxu0 0.0
    %130 = vmatprep.subr.mxu0 0.0
    %131 = vmatpush1.msra.mxu0 0.0
    %132 = vmatprep.subr.mxu0 0.0
    %133 = vmatpush1.msra.mxu0 0.0
    %134 = vmatprep.subr.mxu0 0.0
    %135 = vmatpush1.msra.mxu0 0.0
    %136 = vmatprep.subr.mxu0 0.0
    %137 = vmatpush1.msra.mxu0 0.0
    %138 = vmatprep.subr.mxu0 0.0
    %139 = vmatpush1.msra.mxu0 0.0
    %140 = vmatprep.subr.mxu0 0.0
    %141 = vmatpush1.msra.mxu0 0.0
    %142 = vmatprep.subr.mxu0 0.0
    %143 = vmatpush1.msra.mxu0 0.0
    %144 = vmatprep.subr.mxu0 0.0
    %145 = vmatpush1.msra.mxu0 0.0
    %146 = vmatprep.subr.mxu0 0.0
    %147 = vmatpush1.msra.mxu0 0.0
    %148 = vmatprep.subr.mxu0 0.0
    %149 = vmatpush1.msra.mxu0 0.0
    %150 = vmatprep.subr.mxu0 0.0
    %151 = vmatpush1.msra.mxu0 0.0
    %152 = vmatprep.subr.mxu0 0.0
    %153 = vmatpush1.msra.mxu0 0.0
    %154 = vmatprep.subr.mxu0 0.0
    %155 = vmatpush1.msra.mxu0 0.0
    %156 = vmatprep.subr.mxu0 0.0
    %157 = vmatpush1.msra.mxu0 0.0
    %158 = vmatprep.mubr.f32.mxu0 0.0
    %159 = vmatmul.mubr.f32.gmra.mrb[0].mxu0 %v92
    %v160 = vpop.f32.mrb[0].mxu0
    %v161 = vadd.f32 %v88, %v160
    %v162 = vpop.f32.mrb[0].mxu0
    %163 = vdwg.mxu0
    %v164 = vmax.f32 %v161, 0.0
    %v165 = vld [vmem:[#allocation7] sm:$0xff]
    %v166 = vld [vmem:[#allocation7 + $0x8] sm:$0xff]
    %v167 = vld [vmem:[#allocation7 + $0x10] sm:$0xff]
    %v168 = vld [vmem:[#allocation7 + $0x18] sm:$0xff]
    %v169 = vld [vmem:[%s4] sm:$0x1]
    %v171 = vlaneseq
    %v172 = vshrl.u32 %v171, 7
    %v173 = vsub.s32 0, %v172
    %v174 = vrot.slane %v169, %v173
    %vm176 = vcmask 261120
    %v178 = vsel %vm176, %v164, 0
    %180 = vmatprep.subr.mxu0 0.0
    %181 = vmatpush1.msra.mxu0 %v165
    %182 = vmatprep.subr.mxu0 0.0
    %183 = vmatpush1.msra.mxu0 %v166
    %184 = vmatprep.subr.mxu0 0.0
    %185 = vmatpush1.msra.mxu0 %v167
    %186 = vmatprep.subr.mxu0 0.0
    %187 = vmatpush1.msra.mxu0 %v168
    %188 = vmatprep.subr.mxu0 0.0
    %189 = vmatpush1.msra.mxu0 0.0
    %190 = vmatprep.subr.mxu0 0.0
    %191 = vmatpush1.msra.mxu0 0.0
    %192 = vmatprep.subr.mxu0 0.0
    %193 = vmatpush1.msra.mxu0 0.0
    %194 = vmatprep.subr.mxu0 0.0
    %195 = vmatpush1.msra.mxu0 0.0
    %196 = vmatprep.subr.mxu0 0.0
    %197 = vmatpush1.msra.mxu0 0.0
    %198 = vmatprep.subr.mxu0 0.0
    %199 = vmatpush1.msra.mxu0 0.0
    %200 = vmatprep.subr.mxu0 0.0
    %201 = vmatpush1.msra.mxu0 0.0
    %202 = vmatprep.subr.mxu0 0.0
    %203 = vmatpush1.msra.mxu0 0.0
    %204 = vmatprep.subr.mxu0 0.0
    %205 = vmatpush1.msra.mxu0 0.0
    %206 = vmatprep.subr.mxu0 0.0
    %207 = vmatpush1.msra.mxu0 0.0
    %208 = vmatprep.subr.mxu0 0.0
    %209 = vmatpush1.msra.mxu0 0.0
    %210 = vmatprep.subr.mxu0 0.0
    %211 = vmatpush1.msra.mxu0 0.0
    %212 = vmatprep.subr.mxu0 0.0
    %213 = vmatpush1.msra.mxu0 0.0
    %214 = vmatprep.subr.mxu0 0.0
    %215 = vmatpush1.msra.mxu0 0.0
    %216 = vmatprep.subr.mxu0 0.0
    %217 = vmatpush1.msra.mxu0 0.0
    %218 = vmatprep.subr.mxu0 0.0
    %219 = vmatpush1.msra.mxu0 0.0
    %220 = vmatprep.subr.mxu0 0.0
    %221 = vmatpush1.msra.mxu0 0.0
    %222 = vmatprep.subr.mxu0 0.0
    %223 = vmatpush1.msra.mxu0 0.0
    %224 = vmatprep.subr.mxu0 0.0
    %225 = vmatpush1.msra.mxu0 0.0
    %226 = vmatprep.subr.mxu0 0.0
    %227 = vmatpush1.msra.mxu0 0.0
    %228 = vmatprep.subr.mxu0 0.0
    %229 = vmatpush1.msra.mxu0 0.0
    %230 = vmatprep.subr.mxu0 0.0
    %231 = vmatpush1.msra.mxu0 0.0
    %232 = vmatprep.subr.mxu0 0.0
    %233 = vmatpush1.msra.mxu0 0.0
    %234 = vmatprep.subr.mxu0 0.0
    %235 = vmatpush1.msra.mxu0 0.0
    %236 = vmatprep.subr.mxu0 0.0
    %237 = vmatpush1.msra.mxu0 0.0
    %238 = vmatprep.subr.mxu0 0.0
    %239 = vmatpush1.msra.mxu0 0.0
    %240 = vmatprep.subr.mxu0 0.0
    %241 = vmatpush1.msra.mxu0 0.0
    %242 = vmatprep.subr.mxu0 0.0
    %243 = vmatpush1.msra.mxu0 0.0
    %244 = vmatprep.mubr.f32.mxu0 0.0
    %245 = vmatmul.mubr.f32.gmra.mrb[0].mxu0 %v178
    %v246 = vpop.f32.mrb[0].mxu0
    %v247 = vadd.f32 %v174, %v246
    %v248 = vpop.f32.mrb[0].mxu0
    %249 = vdwg.mxu0
    %v250 = vmax.f32 %v247, 0.0
    %v251 = vld [vmem:[#allocation8] sm:$0xff]
    %v252 = vld [vmem:[#allocation8 + $0x8] sm:$0xff]
    %v253 = vld [vmem:[#allocation8 + $0x10] sm:$0xff]
    %v254 = vld [vmem:[#allocation8 + $0x18] sm:$0xff]
    %v255 = vld [vmem:[%s6] sm:$0x1]
    %v257 = vlaneseq
    %v258 = vshrl.u32 %v257, 7
    %v259 = vsub.s32 0, %v258
    %v260 = vrot.slane %v255, %v259
    %v263 = vsel %vm176, %v250, 0
    %265 = vmatprep.subr.mxu0 0.0
    %266 = vmatpush1.msra.mxu0 %v251
    %267 = vmatprep.subr.mxu0 0.0
    %268 = vmatpush1.msra.mxu0 %v252
    %269 = vmatprep.subr.mxu0 0.0
    %270 = vmatpush1.msra.mxu0 %v253
    %271 = vmatprep.subr.mxu0 0.0
    %272 = vmatpush1.msra.mxu0 %v254
    %273 = vmatprep.subr.mxu0 0.0
    %274 = vmatpush1.msra.mxu0 0.0
    %275 = vmatprep.subr.mxu0 0.0
    %276 = vmatpush1.msra.mxu0 0.0
    %277 = vmatprep.subr.mxu0 0.0
    %278 = vmatpush1.msra.mxu0 0.0
    %279 = vmatprep.subr.mxu0 0.0
    %280 = vmatpush1.msra.mxu0 0.0
    %281 = vmatprep.subr.mxu0 0.0
    %282 = vmatpush1.msra.mxu0 0.0
    %283 = vmatprep.subr.mxu0 0.0
    %284 = vmatpush1.msra.mxu0 0.0
    %285 = vmatprep.subr.mxu0 0.0
    %286 = vmatpush1.msra.mxu0 0.0
    %287 = vmatprep.subr.mxu0 0.0
    %288 = vmatpush1.msra.mxu0 0.0
    %289 = vmatprep.subr.mxu0 0.0
    %290 = vmatpush1.msra.mxu0 0.0
    %291 = vmatprep.subr.mxu0 0.0
    %292 = vmatpush1.msra.mxu0 0.0
    %293 = vmatprep.subr.mxu0 0.0
    %294 = vmatpush1.msra.mxu0 0.0
    %295 = vmatprep.subr.mxu0 0.0
    %296 = vmatpush1.msra.mxu0 0.0
    %297 = vmatprep.subr.mxu0 0.0
    %298 = vmatpush1.msra.mxu0 0.0
    %299 = vmatprep.subr.mxu0 0.0
    %300 = vmatpush1.msra.mxu0 0.0
    %301 = vmatprep.subr.mxu0 0.0
    %302 = vmatpush1.msra.mxu0 0.0
    %303 = vmatprep.subr.mxu0 0.0
    %304 = vmatpush1.msra.mxu0 0.0
    %305 = vmatprep.subr.mxu0 0.0
    %306 = vmatpush1.msra.mxu0 0.0
    %307 = vmatprep.subr.mxu0 0.0
    %308 = vmatpush1.msra.mxu0 0.0
    %309 = vmatprep.subr.mxu0 0.0
    %310 = vmatpush1.msra.mxu0 0.0
    %311 = vmatprep.subr.mxu0 0.0
    %312 = vmatpush1.msra.mxu0 0.0
    %313 = vmatprep.subr.mxu0 0.0
    %314 = vmatpush1.msra.mxu0 0.0
    %315 = vmatprep.subr.mxu0 0.0
    %316 = vmatpush1.msra.mxu0 0.0
    %317 = vmatprep.subr.mxu0 0.0
    %318 = vmatpush1.msra.mxu0 0.0
    %319 = vmatprep.subr.mxu0 0.0
    %320 = vmatpush1.msra.mxu0 0.0
    %321 = vmatprep.subr.mxu0 0.0
    %322 = vmatpush1.msra.mxu0 0.0
    %323 = vmatprep.subr.mxu0 0.0
    %324 = vmatpush1.msra.mxu0 0.0
    %325 = vmatprep.subr.mxu0 0.0
    %326 = vmatpush1.msra.mxu0 0.0
    %327 = vmatprep.subr.mxu0 0.0
    %328 = vmatpush1.msra.mxu0 0.0
    %329 = vmatprep.mubr.f32.mxu0 0.0
    %330 = vmatmul.mubr.f32.gmra.mrb[0].mxu0 %v263
    %v331 = vpop.f32.mrb[0].mxu0
    %v332 = vadd.f32 %v260, %v331
    %v333 = vpop.f32.mrb[0].mxu0
    %334 = vdwg.mxu0
    %335 = vst [vmem:[#allocation10] sm:$0xff] %v332
    // Predicated region
    $region46: #{tpu_custom_call.1} parent=1 // pred_check
      _
    $region47: #{tpu_custom_call.1} parent=1 // pred_check_branch
      %337 = sbr.rel (0) target = $region49
    $region48: #{tpu_custom_call.1} parent=1 // pred_region
      %s339 = ssub.s32 128, 128
      %340 = vsyncadd [#allocation4], %s339
      %s342 = sshll.u32 [#allocation10], 4
      %s343 = int_to_ptr.vmem [resolvable:$true] %s342
      %345 = dma.vmem_to_hbm [thread:$0]  %s343, 128, %s7, [#allocation4]
    $region49: #{tpu_custom_call.1} parent=1 // pred_fallthru
      _
    // Predicated region
    $region50: #{tpu_custom_call.1} parent=1 // pred_check
      _
    $region51: #{tpu_custom_call.1} parent=1 // pred_check_branch
      %347 = sbr.rel (0) target = $region53
    $region52: #{tpu_custom_call.1} parent=1 // pred_region
      %348 = dma.done [#allocation4], 128
    $region53: #{tpu_custom_call.1} parent=1 // pred_fallthru
      _
    %349 = vsyncpa [#allocation3], 1
    %350 = vsyncpa [#allocation6], 1
    %351 = vsyncpa [#allocation9], 1
    %352 = vsyncpa [#allocation4], 1

</llo_original>
